<compile_context>
chip_gen: v5e
topology: v5e:2x2
jax: 0.10.0
libtpu: 0.0.40
codegen_flags: <defaults>
</compile_context>

<pallas_src>
import jax
import jax.numpy as jnp
from jax.experimental import pallas as pl
from jax.experimental.pallas import tpu as pltpu


def actor_critic_kernel(xT_ref, w1T_ref, b1T_ref, w2T_ref, b2T_ref, out_ref):
    # Layer 1 (fused critic+actor), transposed: hT = W1ᵀ @ xT + b1ᵀ, ReLU.
    # (2H, D) @ (D, TB) -> (2H, TB)
    h = jnp.dot(w1T_ref[...], xT_ref[...], preferred_element_type=jnp.float32) + b1T_ref[...]
    h = jnp.maximum(h, 0.0)
    # Layer 2 (block-diagonal packed), transposed: outT = W2ᵀ @ hT + b2ᵀ.
    # (8, 2H) @ (2H, TB) -> (8, TB): rows [value; mu; std; zero-pad].
    out_ref[...] = (
        jnp.dot(w2T_ref[...], h, preferred_element_type=jnp.float32) + b2T_ref[...]
    )


def init_params(key, num_inputs, num_outputs, hidden_size, std=0.0):
    """Mirror init_weights: Linear weights ~ N(0, 0.1), biases = 0.1,
    log_std = ones(1, num_outputs) * std. Weights stored as (in, out)."""
    ks = jax.random.split(key, 4)
    return {
        "w1c": 0.1 * jax.random.normal(ks[0], (num_inputs, hidden_size), jnp.float32),
        "b1c": jnp.full((1, hidden_size), 0.1, jnp.float32),
        "w2c": 0.1 * jax.random.normal(ks[1], (hidden_size, 1), jnp.float32),
        "b2c": jnp.full((1, 1), 0.1, jnp.float32),
        "w1a": 0.1 * jax.random.normal(ks[2], (num_inputs, hidden_size), jnp.float32),
        "b1a": jnp.full((1, hidden_size), 0.1, jnp.float32),
        "w2a": 0.1 * jax.random.normal(ks[3], (hidden_size, num_outputs), jnp.float32),
        "b2a": jnp.full((1, num_outputs), 0.1, jnp.float32),
        "log_std": jnp.full((1, num_outputs), std, jnp.float32),
    }


def pack_params(p):
    """One-time host-side packing: fuse actor + critic into a single transposed
    2-layer MLP whose second layer emits rows [value; mu; std; pad-to-8]."""
    D, H = p["w1c"].shape
    O = p["w2a"].shape[1]
    rows = ((1 + 2 * O + 7) // 8) * 8  # sublane-aligned output row count

    # Layer 1: concat along output features, then transpose -> (2H, D), (2H, 1).
    w1T = jnp.concatenate([p["w1c"], p["w1a"]], axis=1).T
    b1T = jnp.concatenate([p["b1c"], p["b1a"]], axis=1).T

    # Layer 2: block-diagonal, transposed -> (rows, 2H).
    #   row 0            : value  (critic head, reads h[:H])
    #   rows 1 .. 1+O    : mu     (actor head,  reads h[H:])
    #   rows 1+O .. 1+2O : std    (zero weights; bias = exp(log_std))
    w2T = jnp.zeros((rows, 2 * H), jnp.float32)
    w2T = w2T.at[0:1, :H].set(p["w2c"].T)
    w2T = w2T.at[1:1 + O, H:].set(p["w2a"].T)

    b2T = jnp.zeros((rows, 1), jnp.float32)
    b2T = b2T.at[0:1, :].set(p["b2c"].T)
    b2T = b2T.at[1:1 + O, :].set(p["b2a"].T)
    b2T = b2T.at[1 + O:1 + 2 * O, :].set(jnp.exp(p["log_std"]).T)

    return {"w1T": w1T, "b1T": b1T, "w2T": w2T, "b2T": b2T, "O": O, "ROWS": rows}


def _round_up(n, m):
    return ((n + m - 1) // m) * m


def actor_critic_forward(x, packed, *, block_b=1024):
    B, D = x.shape
    O = packed["O"]
    rows = packed["ROWS"]
    w1T, b1T, w2T, b2T = packed["w1T"], packed["b1T"], packed["w2T"], packed["b2T"]
    H2 = w1T.shape[0]

    xT = x.T  # (D, B): layout plumbing so batch rides the lane axis in-kernel.

    if B <= 128:
        # Single grid step; block equals full array (no 128-multiple requirement).
        TB = B
        B_pad = B
    else:
        # >=2 parallel grid steps (v7x megacore), lane tiles multiple of 128,
        # capped at block_b; ceiling-divide + one zero-pad handles ragged batches.
        TB = min(block_b, _round_up(pl.cdiv(B, 2), 128))
        B_pad = _round_up(B, TB)
        if B_pad != B:
            xT = jnp.pad(xT, ((0, 0), (0, B_pad - B)))
    grid = (B_pad // TB,)

    const = lambda i: (0, 0)  # weights stay resident in VMEM across grid steps

    out = pl.pallas_call(
        actor_critic_kernel,
        out_shape=jax.ShapeDtypeStruct((rows, B_pad), jnp.float32),
        grid_spec=pltpu.PrefetchScalarGridSpec(
            num_scalar_prefetch=0,
            grid=grid,
            in_specs=[
                pl.BlockSpec((D, TB), lambda i: (0, i)),    # xT batch tile
                pl.BlockSpec((H2, D), const),               # fused W1ᵀ
                pl.BlockSpec((H2, 1), const),               # fused b1ᵀ
                pl.BlockSpec((rows, H2), const),            # fused W2ᵀ (block-diag)
                pl.BlockSpec((rows, 1), const),             # fused b2ᵀ (+ exp(log_std))
            ],
            out_specs=pl.BlockSpec((rows, TB), lambda i: (0, i)),
        ),
        compiler_params=pltpu.CompilerParams(
            dimension_semantics=("parallel",),
        ),
    )(xT, w1T, b1T, w2T, b2T)

    value = out[0:1, :B].T
    mu = out[1:1 + O, :B].T
    std = out[1 + O:1 + 2 * O, :B].T
    return mu, std, value


def reference_forward(x, p):
    hc = jnp.maximum(x @ p["w1c"] + p["b1c"], 0.0)
    value = hc @ p["w2c"] + p["b2c"]
    ha = jnp.maximum(x @ p["w1a"] + p["b1a"], 0.0)
    mu = ha @ p["w2a"] + p["b2a"]
    std = jnp.broadcast_to(jnp.exp(p["log_std"]), mu.shape)
    return mu, std, value


if __name__ == "__main__":
    # Pendulum-v0: obs dim 3, action dim 1; hidden_size 256 as in the module.
    num_inputs, num_outputs, hidden_size = 3, 1, 256

    key = jax.random.PRNGKey(0)
    k_param, k_x1, k_x2 = jax.random.split(key, 3)
    params = init_params(k_param, num_inputs, num_outputs, hidden_size, std=0.0)
    packed = pack_params(params)

    # Small batch (single-step grid, block == full array).
    x_small = jax.random.normal(k_x1, (8, num_inputs), jnp.float32)
    mu, std, value = actor_critic_forward(x_small, packed)
    jax.block_until_ready((mu, std, value))
    mu_r, std_r, val_r = reference_forward(x_small, params)
    assert mu.shape == mu_r.shape and std.shape == std_r.shape and value.shape == val_r.shape
    assert jnp.allclose(mu, mu_r, atol=1e-5), "mu mismatch (small batch)"
    assert jnp.allclose(std, std_r, atol=1e-6), "std mismatch (small batch)"
    assert jnp.allclose(value, val_r, atol=1e-5), "value mismatch (small batch)"

    # Ragged larger batch (exercises 128-multiple tiling, zero-pad, 2-step parallel grid).
    x_big = jax.random.normal(k_x2, (200, num_inputs), jnp.float32)
    mu, std, value = actor_critic_forward(x_big, packed)
    jax.block_until_ready((mu, std, value))
    mu_r, std_r, val_r = reference_forward(x_big, params)
    assert jnp.allclose(mu, mu_r, atol=1e-5), "mu mismatch (big batch)"
    assert jnp.allclose(std, std_r, atol=1e-6), "std mismatch (big batch)"
    assert jnp.allclose(value, val_r, atol=1e-5), "value mismatch (big batch)"

    print("KERNEL_OK")
</pallas_src>

<mosaic_0001>
module attributes {stable_mosaic.version = 11 : i64} {
  func.func @actor_critic_kernel(%arg0: i32, %arg1: memref<3x8xf32, #tpu.memory_space<vmem>>, %arg2: memref<512x3xf32, #tpu.memory_space<vmem>>, %arg3: memref<512x1xf32, #tpu.memory_space<vmem>>, %arg4: memref<8x512xf32, #tpu.memory_space<vmem>>, %arg5: memref<8x1xf32, #tpu.memory_space<vmem>>, %arg6: memref<8x8xf32, #tpu.memory_space<vmem>>) attributes {dimension_semantics = [#tpu.dimension_semantics<parallel>], iteration_bounds = array<i64: 1>, scalar_prefetch = 0 : i64, scratch_operands = 0 : i64, tpu.core_type = #tpu.core_type<tc>, window_params = [{transform_indices = @transform_0, window_bounds = array<i64: 3, 8>}, {pipeline_mode = #tpu.pipeline_mode<synchronous>, transform_indices = @transform_1, window_bounds = array<i64: 512, 3>}, {pipeline_mode = #tpu.pipeline_mode<synchronous>, transform_indices = @transform_2, window_bounds = array<i64: 512, 1>}, {pipeline_mode = #tpu.pipeline_mode<synchronous>, transform_indices = @transform_3, window_bounds = array<i64: 8, 512>}, {pipeline_mode = #tpu.pipeline_mode<synchronous>, transform_indices = @transform_4, window_bounds = array<i64: 8, 1>}, {transform_indices = @transform_5, window_bounds = array<i64: 8, 8>}]} {
    %c0 = arith.constant 0 : index
    %c0_0 = arith.constant 0 : index
    %0 = vector.load %arg2[%c0, %c0_0] : memref<512x3xf32, #tpu.memory_space<vmem>>, vector<512x3xf32>
    %c0_1 = arith.constant 0 : index
    %c0_2 = arith.constant 0 : index
    %1 = vector.load %arg1[%c0_1, %c0_2] : memref<3x8xf32, #tpu.memory_space<vmem>>, vector<3x8xf32>
    %cst = arith.constant dense<0.000000e+00> : vector<512x8xf32>
    %2 = tpu.matmul %0, %1, %cst {dimension_numbers = #tpu.dot_dimension_numbers<[1], [0], [0], [1], [0, 0, 1, 1], [], []>} : vector<512x3xf32>, vector<3x8xf32>, vector<512x8xf32> -> vector<512x8xf32>
    %c0_3 = arith.constant 0 : index
    %c0_4 = arith.constant 0 : index
    %3 = vector.load %arg3[%c0_3, %c0_4] : memref<512x1xf32, #tpu.memory_space<vmem>>, vector<512x1xf32>
    %4 = vector.broadcast %3 : vector<512x1xf32> to vector<512x8xf32>
    %5 = arith.addf %2, %4 : vector<512x8xf32>
    %cst_5 = arith.constant 0.000000e+00 : f32
    %6 = vector.broadcast %cst_5 : f32 to vector<512x8xf32>
    %7 = arith.maximumf %5, %6 : vector<512x8xf32>
    %c0_6 = arith.constant 0 : index
    %c0_7 = arith.constant 0 : index
    %8 = vector.load %arg4[%c0_6, %c0_7] : memref<8x512xf32, #tpu.memory_space<vmem>>, vector<8x512xf32>
    %cst_8 = arith.constant dense<0.000000e+00> : vector<8x8xf32>
    %9 = tpu.matmul %8, %7, %cst_8 {dimension_numbers = #tpu.dot_dimension_numbers<[1], [0], [0], [1], [0, 0, 1, 1], [], []>} : vector<8x512xf32>, vector<512x8xf32>, vector<8x8xf32> -> vector<8x8xf32>
    %c0_9 = arith.constant 0 : index
    %c0_10 = arith.constant 0 : index
    %10 = vector.load %arg5[%c0_9, %c0_10] : memref<8x1xf32, #tpu.memory_space<vmem>>, vector<8x1xf32>
    %11 = vector.broadcast %10 : vector<8x1xf32> to vector<8x8xf32>
    %12 = arith.addf %9, %11 : vector<8x8xf32>
    %c0_11 = arith.constant 0 : index
    %c0_12 = arith.constant 0 : index
    %13 = vector.load %arg6[%c0_11, %c0_12] : memref<8x8xf32, #tpu.memory_space<vmem>>, vector<8x8xf32>
    tpu.vector_store %arg6[%c0_11, %c0_12], %12 {strides = array<i32>} : memref<8x8xf32, #tpu.memory_space<vmem>>, vector<8x8xf32>,
    return
  }
  func.func @transform_0(%arg0: i32) -> (i32, i32) {
    %c0_i32 = arith.constant 0 : i32
    %c0_i32_0 = arith.constant 0 : i32
    return %c0_i32, %arg0 : i32, i32
  }
  func.func @transform_1(%arg0: i32) -> (i32, i32) {
    %c0_i32 = arith.constant 0 : i32
    %c0_i32_0 = arith.constant 0 : i32
    %c0_i32_1 = arith.constant 0 : i32
    return %c0_i32, %c0_i32_0 : i32, i32
  }
  func.func @transform_2(%arg0: i32) -> (i32, i32) {
    %c0_i32 = arith.constant 0 : i32
    %c0_i32_0 = arith.constant 0 : i32
    %c0_i32_1 = arith.constant 0 : i32
    return %c0_i32, %c0_i32_0 : i32, i32
  }
  func.func @transform_3(%arg0: i32) -> (i32, i32) {
    %c0_i32 = arith.constant 0 : i32
    %c0_i32_0 = arith.constant 0 : i32
    %c0_i32_1 = arith.constant 0 : i32
    return %c0_i32, %c0_i32_0 : i32, i32
  }
  func.func @transform_4(%arg0: i32) -> (i32, i32) {
    %c0_i32 = arith.constant 0 : i32
    %c0_i32_0 = arith.constant 0 : i32
    %c0_i32_1 = arith.constant 0 : i32
    return %c0_i32, %c0_i32_0 : i32, i32
  }
  func.func @transform_5(%arg0: i32) -> (i32, i32) {
    %c0_i32 = arith.constant 0 : i32
    %c0_i32_0 = arith.constant 0 : i32
    return %c0_i32, %arg0 : i32, i32
  }
}

</mosaic_0001>

<llo_original>
// kernel: tpu_custom_call.1
$region0: #{tpu_custom_call.1}
  #allocation0 [shape = 'u32[]', space=smem, size = 0x4, offset = 0x4, fixed_abs, tag = 'smem constant byte address 0x4 - core index']
  #allocation1 [shape = 'u32[72,128]{1,0:T(1,128)}', space=vmem, size = 0x9000, scoped, tag = 'internal scratch']
  %s0 = inlined_call_operand.vmem [shape: f32[3,8], index: 0, kind: input, shape index: {}]
  %s1 = inlined_call_operand.vmem [shape: f32[512,3], index: 1, kind: input, shape index: {}]
  %s2 = inlined_call_operand.vmem [shape: f32[512,1], index: 2, kind: input, shape index: {}]
  %s3 = inlined_call_operand.vmem [shape: f32[8,512], index: 3, kind: input, shape index: {}]
  %s4 = inlined_call_operand.vmem [shape: f32[8,1], index: 4, kind: input, shape index: {}]
  %s5 = inlined_call_operand.hbm [shape: f32[8,8], index: 5, kind: output, shape index: {}]
  %s6 = sld [smem:[#allocation0]]
  $region30: #{tpu_custom_call.1} parent=0
    _
  %s8 = ssub.s32 1, %s6
  %s9 = scalar_select 0, %s8, %s6
  $region1: #{tpu_custom_call.1} parent=0
    #allocation2 [shape = 'u8[4096]{0}', space=vmem, size = 0x1000, scoped, tag = 'output window, operand 0, single buffered']
    #allocation3 [shape = 's32[1]{0}', space=sflag, size = 0x4, scoped, tag = 'scoped memory for tpu_custom_call.1']
    %10 = vsyncpa [#allocation3], 0
    // Predicated region
    $region2: #{tpu_custom_call.1} parent=1 // pred_check
      _
    $region3: #{tpu_custom_call.1} parent=1 // pred_check_branch
      %12 = sbr.rel (0) target = $region5
    $region4: #{tpu_custom_call.1} parent=1 // pred_region
      _
    $region5: #{tpu_custom_call.1} parent=1 // pred_fallthru
      _
    // Predicated region
    $region6: #{tpu_custom_call.1} parent=1 // pred_check
      _
    $region7: #{tpu_custom_call.1} parent=1 // pred_check_branch
      %14 = sbr.rel (0) target = $region9
    $region8: #{tpu_custom_call.1} parent=1 // pred_region
      _
    $region9: #{tpu_custom_call.1} parent=1 // pred_fallthru
      _
    // Predicated region
    $region10: #{tpu_custom_call.1} parent=1 // pred_check
      _
    $region11: #{tpu_custom_call.1} parent=1 // pred_check_branch
      %16 = sbr.rel (0) target = $region13
    $region12: #{tpu_custom_call.1} parent=1 // pred_region
      _
    $region13: #{tpu_custom_call.1} parent=1 // pred_fallthru
      _
    // Predicated region
    $region14: #{tpu_custom_call.1} parent=1 // pred_check
      _
    $region15: #{tpu_custom_call.1} parent=1 // pred_check_branch
      %18 = sbr.rel (0) target = $region17
    $region16: #{tpu_custom_call.1} parent=1 // pred_region
      _
    $region17: #{tpu_custom_call.1} parent=1 // pred_fallthru
      _
    // Predicated region
    $region18: #{tpu_custom_call.1} parent=1 // pred_check
      _
    $region19: #{tpu_custom_call.1} parent=1 // pred_check_branch
      %20 = sbr.rel (0) target = $region21
    $region20: #{tpu_custom_call.1} parent=1 // pred_region
      _
    $region21: #{tpu_custom_call.1} parent=1 // pred_fallthru
      _
    %v21 = vld [vmem:[%s1] sm:$0xff]
    %v22 = vld [vmem:[%s1 + $0x8] sm:$0xff]
    %v23 = vld [vmem:[%s1 + $0x10] sm:$0xff]
    %v24 = vld [vmem:[%s1 + $0x18] sm:$0xff]
    %v25 = vld [vmem:[%s1 + $0x20] sm:$0xff]
    %v26 = vld [vmem:[%s1 + $0x28] sm:$0xff]
    %v27 = vld [vmem:[%s1 + $0x30] sm:$0xff]
    %v28 = vld [vmem:[%s1 + $0x38] sm:$0xff]
    %v29 = vld [vmem:[%s1 + $0x40] sm:$0xff]
    %v30 = vld [vmem:[%s1 + $0x48] sm:$0xff]
    %v31 = vld [vmem:[%s1 + $0x50] sm:$0xff]
    %v32 = vld [vmem:[%s1 + $0x58] sm:$0xff]
    %v33 = vld [vmem:[%s1 + $0x60] sm:$0xff]
    %v34 = vld [vmem:[%s1 + $0x68] sm:$0xff]
    %v35 = vld [vmem:[%s1 + $0x70] sm:$0xff]
    %v36 = vld [vmem:[%s1 + $0x78] sm:$0xff]
    %v37 = vld [vmem:[%s1 + $0x80] sm:$0xff]
    %v38 = vld [vmem:[%s1 + $0x88] sm:$0xff]
    %v39 = vld [vmem:[%s1 + $0x90] sm:$0xff]
    %v40 = vld [vmem:[%s1 + $0x98] sm:$0xff]
    %v41 = vld [vmem:[%s1 + $0xa0] sm:$0xff]
    %v42 = vld [vmem:[%s1 + $0xa8] sm:$0xff]
    %v43 = vld [vmem:[%s1 + $0xb0] sm:$0xff]
    %v44 = vld [vmem:[%s1 + $0xb8] sm:$0xff]
    %v45 = vld [vmem:[%s1 + $0xc0] sm:$0xff]
    %v46 = vld [vmem:[%s1 + $0xc8] sm:$0xff]
    %v47 = vld [vmem:[%s1 + $0xd0] sm:$0xff]
    %v48 = vld [vmem:[%s1 + $0xd8] sm:$0xff]
    %v49 = vld [vmem:[%s1 + $0xe0] sm:$0xff]
    %v50 = vld [vmem:[%s1 + $0xe8] sm:$0xff]
    %v51 = vld [vmem:[%s1 + $0xf0] sm:$0xff]
    %v52 = vld [vmem:[%s1 + $0xf8] sm:$0xff]
    %v53 = vld [vmem:[%s1 + $0x100] sm:$0xff]
    %v54 = vld [vmem:[%s1 + $0x108] sm:$0xff]
    %v55 = vld [vmem:[%s1 + $0x110] sm:$0xff]
    %v56 = vld [vmem:[%s1 + $0x118] sm:$0xff]
    %v57 = vld [vmem:[%s1 + $0x120] sm:$0xff]
    %v58 = vld [vmem:[%s1 + $0x128] sm:$0xff]
    %v59 = vld [vmem:[%s1 + $0x130] sm:$0xff]
    %v60 = vld [vmem:[%s1 + $0x138] sm:$0xff]
    %v61 = vld [vmem:[%s1 + $0x140] sm:$0xff]
    %v62 = vld [vmem:[%s1 + $0x148] sm:$0xff]
    %v63 = vld [vmem:[%s1 + $0x150] sm:$0xff]
    %v64 = vld [vmem:[%s1 + $0x158] sm:$0xff]
    %v65 = vld [vmem:[%s1 + $0x160] sm:$0xff]
    %v66 = vld [vmem:[%s1 + $0x168] sm:$0xff]
    %v67 = vld [vmem:[%s1 + $0x170] sm:$0xff]
    %v68 = vld [vmem:[%s1 + $0x178] sm:$0xff]
    %v69 = vld [vmem:[%s1 + $0x180] sm:$0xff]
    %v70 = vld [vmem:[%s1 + $0x188] sm:$0xff]
    %v71 = vld [vmem:[%s1 + $0x190] sm:$0xff]
    %v72 = vld [vmem:[%s1 + $0x198] sm:$0xff]
    %v73 = vld [vmem:[%s1 + $0x1a0] sm:$0xff]
    %v74 = vld [vmem:[%s1 + $0x1a8] sm:$0xff]
    %v75 = vld [vmem:[%s1 + $0x1b0] sm:$0xff]
    %v76 = vld [vmem:[%s1 + $0x1b8] sm:$0xff]
    %v77 = vld [vmem:[%s1 + $0x1c0] sm:$0xff]
    %v78 = vld [vmem:[%s1 + $0x1c8] sm:$0xff]
    %v79 = vld [vmem:[%s1 + $0x1d0] sm:$0xff]
    %v80 = vld [vmem:[%s1 + $0x1d8] sm:$0xff]
    %v81 = vld [vmem:[%s1 + $0x1e0] sm:$0xff]
    %v82 = vld [vmem:[%s1 + $0x1e8] sm:$0xff]
    %v83 = vld [vmem:[%s1 + $0x1f0] sm:$0xff]
    %v84 = vld [vmem:[%s1 + $0x1f8] sm:$0xff]
    %v85 = vld [vmem:[%s0] sm:$0x7]
    %v86 = vld [vmem:[%s2] sm:$0xff]
    %v87 = vld [vmem:[%s2 + $0x8] sm:$0xff]
    %v88 = vld [vmem:[%s2 + $0x10] sm:$0xff]
    %v89 = vld [vmem:[%s2 + $0x18] sm:$0xff]
    %v90 = vld [vmem:[%s2 + $0x20] sm:$0xff]
    %v91 = vld [vmem:[%s2 + $0x28] sm:$0xff]
    %v92 = vld [vmem:[%s2 + $0x30] sm:$0xff]
    %v93 = vld [vmem:[%s2 + $0x38] sm:$0xff]
    %v94 = vld [vmem:[%s2 + $0x40] sm:$0xff]
    %v95 = vld [vmem:[%s2 + $0x48] sm:$0xff]
    %v96 = vld [vmem:[%s2 + $0x50] sm:$0xff]
    %v97 = vld [vmem:[%s2 + $0x58] sm:$0xff]
    %v98 = vld [vmem:[%s2 + $0x60] sm:$0xff]
    %v99 = vld [vmem:[%s2 + $0x68] sm:$0xff]
    %v100 = vld [vmem:[%s2 + $0x70] sm:$0xff]
    %v101 = vld [vmem:[%s2 + $0x78] sm:$0xff]
    %v102 = vld [vmem:[%s2 + $0x80] sm:$0xff]
    %v103 = vld [vmem:[%s2 + $0x88] sm:$0xff]
    %v104 = vld [vmem:[%s2 + $0x90] sm:$0xff]
    %v105 = vld [vmem:[%s2 + $0x98] sm:$0xff]
    %v106 = vld [vmem:[%s2 + $0xa0] sm:$0xff]
    %v107 = vld [vmem:[%s2 + $0xa8] sm:$0xff]
    %v108 = vld [vmem:[%s2 + $0xb0] sm:$0xff]
    %v109 = vld [vmem:[%s2 + $0xb8] sm:$0xff]
    %v110 = vld [vmem:[%s2 + $0xc0] sm:$0xff]
    %v111 = vld [vmem:[%s2 + $0xc8] sm:$0xff]
    %v112 = vld [vmem:[%s2 + $0xd0] sm:$0xff]
    %v113 = vld [vmem:[%s2 + $0xd8] sm:$0xff]
    %v114 = vld [vmem:[%s2 + $0xe0] sm:$0xff]
    %v115 = vld [vmem:[%s2 + $0xe8] sm:$0xff]
    %v116 = vld [vmem:[%s2 + $0xf0] sm:$0xff]
    %v117 = vld [vmem:[%s2 + $0xf8] sm:$0xff]
    %v118 = vld [vmem:[%s2 + $0x100] sm:$0xff]
    %v119 = vld [vmem:[%s2 + $0x108] sm:$0xff]
    %v120 = vld [vmem:[%s2 + $0x110] sm:$0xff]
    %v121 = vld [vmem:[%s2 + $0x118] sm:$0xff]
    %v122 = vld [vmem:[%s2 + $0x120] sm:$0xff]
    %v123 = vld [vmem:[%s2 + $0x128] sm:$0xff]
    %v124 = vld [vmem:[%s2 + $0x130] sm:$0xff]
    %v125 = vld [vmem:[%s2 + $0x138] sm:$0xff]
    %v126 = vld [vmem:[%s2 + $0x140] sm:$0xff]
    %v127 = vld [vmem:[%s2 + $0x148] sm:$0xff]
    %v128 = vld [vmem:[%s2 + $0x150] sm:$0xff]
    %v129 = vld [vmem:[%s2 + $0x158] sm:$0xff]
    %v130 = vld [vmem:[%s2 + $0x160] sm:$0xff]
    %v131 = vld [vmem:[%s2 + $0x168] sm:$0xff]
    %v132 = vld [vmem:[%s2 + $0x170] sm:$0xff]
    %v133 = vld [vmem:[%s2 + $0x178] sm:$0xff]
    %v134 = vld [vmem:[%s2 + $0x180] sm:$0xff]
    %v135 = vld [vmem:[%s2 + $0x188] sm:$0xff]
    %v136 = vld [vmem:[%s2 + $0x190] sm:$0xff]
    %v137 = vld [vmem:[%s2 + $0x198] sm:$0xff]
    %v138 = vld [vmem:[%s2 + $0x1a0] sm:$0xff]
    %v139 = vld [vmem:[%s2 + $0x1a8] sm:$0xff]
    %v140 = vld [vmem:[%s2 + $0x1b0] sm:$0xff]
    %v141 = vld [vmem:[%s2 + $0x1b8] sm:$0xff]
    %v142 = vld [vmem:[%s2 + $0x1c0] sm:$0xff]
    %v143 = vld [vmem:[%s2 + $0x1c8] sm:$0xff]
    %v144 = vld [vmem:[%s2 + $0x1d0] sm:$0xff]
    %v145 = vld [vmem:[%s2 + $0x1d8] sm:$0xff]
    %v146 = vld [vmem:[%s2 + $0x1e0] sm:$0xff]
    %v147 = vld [vmem:[%s2 + $0x1e8] sm:$0xff]
    %v148 = vld [vmem:[%s2 + $0x1f0] sm:$0xff]
    %v149 = vld [vmem:[%s2 + $0x1f8] sm:$0xff]
    %151 = vset.pattern.permute.xlu0 0
    %152 = vperm.xlu0 %151, %v86
    %v153 = vpop.permute.xlu0 %152
    %156 = vset.pattern.permute.xlu0 0
    %157 = vperm.xlu0 %156, %v87
    %v158 = vpop.permute.xlu0 %157
    %161 = vset.pattern.permute.xlu0 0
    %162 = vperm.xlu0 %161, %v88
    %v163 = vpop.permute.xlu0 %162
    %166 = vset.pattern.permute.xlu0 0
    %167 = vperm.xlu0 %166, %v89
    %v168 = vpop.permute.xlu0 %167
    %171 = vset.pattern.permute.xlu0 0
    %172 = vperm.xlu0 %171, %v90
    %v173 = vpop.permute.xlu0 %172
    %176 = vset.pattern.permute.xlu0 0
    %177 = vperm.xlu0 %176, %v91
    %v178 = vpop.permute.xlu0 %177
    %181 = vset.pattern.permute.xlu0 0
    %182 = vperm.xlu0 %181, %v92
    %v183 = vpop.permute.xlu0 %182
    %186 = vset.pattern.permute.xlu0 0
    %187 = vperm.xlu0 %186, %v93
    %v188 = vpop.permute.xlu0 %187
    %191 = vset.pattern.permute.xlu0 0
    %192 = vperm.xlu0 %191, %v94
    %v193 = vpop.permute.xlu0 %192
    %196 = vset.pattern.permute.xlu0 0
    %197 = vperm.xlu0 %196, %v95
    %v198 = vpop.permute.xlu0 %197
    %201 = vset.pattern.permute.xlu0 0
    %202 = vperm.xlu0 %201, %v96
    %v203 = vpop.permute.xlu0 %202
    %206 = vset.pattern.permute.xlu0 0
    %207 = vperm.xlu0 %206, %v97
    %v208 = vpop.permute.xlu0 %207
    %211 = vset.pattern.permute.xlu0 0
    %212 = vperm.xlu0 %211, %v98
    %v213 = vpop.permute.xlu0 %212
    %216 = vset.pattern.permute.xlu0 0
    %217 = vperm.xlu0 %216, %v99
    %v218 = vpop.permute.xlu0 %217
    %221 = vset.pattern.permute.xlu0 0
    %222 = vperm.xlu0 %221, %v100
    %v223 = vpop.permute.xlu0 %222
    %226 = vset.pattern.permute.xlu0 0
    %227 = vperm.xlu0 %226, %v101
    %v228 = vpop.permute.xlu0 %227
    %231 = vset.pattern.permute.xlu0 0
    %232 = vperm.xlu0 %231, %v102
    %v233 = vpop.permute.xlu0 %232
    %236 = vset.pattern.permute.xlu0 0
    %237 = vperm.xlu0 %236, %v103
    %v238 = vpop.permute.xlu0 %237
    %241 = vset.pattern.permute.xlu0 0
    %242 = vperm.xlu0 %241, %v104
    %v243 = vpop.permute.xlu0 %242
    %246 = vset.pattern.permute.xlu0 0
    %247 = vperm.xlu0 %246, %v105
    %v248 = vpop.permute.xlu0 %247
    %251 = vset.pattern.permute.xlu0 0
    %252 = vperm.xlu0 %251, %v106
    %v253 = vpop.permute.xlu0 %252
    %256 = vset.pattern.permute.xlu0 0
    %257 = vperm.xlu0 %256, %v107
    %v258 = vpop.permute.xlu0 %257
    %261 = vset.pattern.permute.xlu0 0
    %262 = vperm.xlu0 %261, %v108
    %v263 = vpop.permute.xlu0 %262
    %266 = vset.pattern.permute.xlu0 0
    %267 = vperm.xlu0 %266, %v109
    %v268 = vpop.permute.xlu0 %267
    %271 = vset.pattern.permute.xlu0 0
    %272 = vperm.xlu0 %271, %v110
    %v273 = vpop.permute.xlu0 %272
    %276 = vset.pattern.permute.xlu0 0
    %277 = vperm.xlu0 %276, %v111
    %v278 = vpop.permute.xlu0 %277
    %281 = vset.pattern.permute.xlu0 0
    %282 = vperm.xlu0 %281, %v112
    %v283 = vpop.permute.xlu0 %282
    %286 = vset.pattern.permute.xlu0 0
    %287 = vperm.xlu0 %286, %v113
    %v288 = vpop.permute.xlu0 %287
    %291 = vset.pattern.permute.xlu0 0
    %292 = vperm.xlu0 %291, %v114
    %v293 = vpop.permute.xlu0 %292
    %296 = vset.pattern.permute.xlu0 0
    %297 = vperm.xlu0 %296, %v115
    %v298 = vpop.permute.xlu0 %297
    %301 = vset.pattern.permute.xlu0 0
    %302 = vperm.xlu0 %301, %v116
    %v303 = vpop.permute.xlu0 %302
    %306 = vset.pattern.permute.xlu0 0
    %307 = vperm.xlu0 %306, %v117
    %v308 = vpop.permute.xlu0 %307
    %311 = vset.pattern.permute.xlu0 0
    %312 = vperm.xlu0 %311, %v118
    %v313 = vpop.permute.xlu0 %312
    %316 = vset.pattern.permute.xlu0 0
    %317 = vperm.xlu0 %316, %v119
    %v318 = vpop.permute.xlu0 %317
    %321 = vset.pattern.permute.xlu0 0
    %322 = vperm.xlu0 %321, %v120
    %v323 = vpop.permute.xlu0 %322
    %326 = vset.pattern.permute.xlu0 0
    %327 = vperm.xlu0 %326, %v121
    %v328 = vpop.permute.xlu0 %327
    %331 = vset.pattern.permute.xlu0 0
    %332 = vperm.xlu0 %331, %v122
    %v333 = vpop.permute.xlu0 %332
    %336 = vset.pattern.permute.xlu0 0
    %337 = vperm.xlu0 %336, %v123
    %v338 = vpop.permute.xlu0 %337
    %341 = vset.pattern.permute.xlu0 0
    %342 = vperm.xlu0 %341, %v124
    %v343 = vpop.permute.xlu0 %342
    %346 = vset.pattern.permute.xlu0 0
    %347 = vperm.xlu0 %346, %v125
    %v348 = vpop.permute.xlu0 %347
    %351 = vset.pattern.permute.xlu0 0
    %352 = vperm.xlu0 %351, %v126
    %v353 = vpop.permute.xlu0 %352
    %356 = vset.pattern.permute.xlu0 0
    %357 = vperm.xlu0 %356, %v127
    %v358 = vpop.permute.xlu0 %357
    %361 = vset.pattern.permute.xlu0 0
    %362 = vperm.xlu0 %361, %v128
    %v363 = vpop.permute.xlu0 %362
    %366 = vset.pattern.permute.xlu0 0
    %367 = vperm.xlu0 %366, %v129
    %v368 = vpop.permute.xlu0 %367
    %371 = vset.pattern.permute.xlu0 0
    %372 = vperm.xlu0 %371, %v130
    %v373 = vpop.permute.xlu0 %372
    %376 = vset.pattern.permute.xlu0 0
    %377 = vperm.xlu0 %376, %v131
    %v378 = vpop.permute.xlu0 %377
    %381 = vset.pattern.permute.xlu0 0
    %382 = vperm.xlu0 %381, %v132
    %v383 = vpop.permute.xlu0 %382
    %386 = vset.pattern.permute.xlu0 0
    %387 = vperm.xlu0 %386, %v133
    %v388 = vpop.permute.xlu0 %387
    %391 = vset.pattern.permute.xlu0 0
    %392 = vperm.xlu0 %391, %v134
    %v393 = vpop.permute.xlu0 %392
    %396 = vset.pattern.permute.xlu0 0
    %397 = vperm.xlu0 %396, %v135
    %v398 = vpop.permute.xlu0 %397
    %401 = vset.pattern.permute.xlu0 0
    %402 = vperm.xlu0 %401, %v136
    %v403 = vpop.permute.xlu0 %402
    %406 = vset.pattern.permute.xlu0 0
    %407 = vperm.xlu0 %406, %v137
    %v408 = vpop.permute.xlu0 %407
    %411 = vset.pattern.permute.xlu0 0
    %412 = vperm.xlu0 %411, %v138
    %v413 = vpop.permute.xlu0 %412
    %416 = vset.pattern.permute.xlu0 0
    %417 = vperm.xlu0 %416, %v139
    %v418 = vpop.permute.xlu0 %417
    %421 = vset.pattern.permute.xlu0 0
    %422 = vperm.xlu0 %421, %v140
    %v423 = vpop.permute.xlu0 %422
    %426 = vset.pattern.permute.xlu0 0
    %427 = vperm.xlu0 %426, %v141
    %v428 = vpop.permute.xlu0 %427
    %431 = vset.pattern.permute.xlu0 0
    %432 = vperm.xlu0 %431, %v142
    %v433 = vpop.permute.xlu0 %432
    %436 = vset.pattern.permute.xlu0 0
    %437 = vperm.xlu0 %436, %v143
    %v438 = vpop.permute.xlu0 %437
    %441 = vset.pattern.permute.xlu0 0
    %442 = vperm.xlu0 %441, %v144
    %v443 = vpop.permute.xlu0 %442
    %446 = vset.pattern.permute.xlu0 0
    %447 = vperm.xlu0 %446, %v145
    %v448 = vpop.permute.xlu0 %447
    %451 = vset.pattern.permute.xlu0 0
    %452 = vperm.xlu0 %451, %v146
    %v453 = vpop.permute.xlu0 %452
    %456 = vset.pattern.permute.xlu0 0
    %457 = vperm.xlu0 %456, %v147
    %v458 = vpop.permute.xlu0 %457
    %461 = vset.pattern.permute.xlu0 0
    %462 = vperm.xlu0 %461, %v148
    %v463 = vpop.permute.xlu0 %462
    %466 = vset.pattern.permute.xlu0 0
    %467 = vperm.xlu0 %466, %v149
    %v468 = vpop.permute.xlu0 %467
    %vm470 = vcmask 23552
    %v472 = vsel %vm470, %v21, 0
    %v475 = vsel %vm470, %v22, 0
    %v478 = vsel %vm470, %v23, 0
    %v481 = vsel %vm470, %v24, 0
    %v484 = vsel %vm470, %v25, 0
    %v487 = vsel %vm470, %v26, 0
    %v490 = vsel %vm470, %v27, 0
    %v493 = vsel %vm470, %v28, 0
    %v496 = vsel %vm470, %v29, 0
    %v499 = vsel %vm470, %v30, 0
    %v502 = vsel %vm470, %v31, 0
    %v505 = vsel %vm470, %v32, 0
    %v508 = vsel %vm470, %v33, 0
    %v511 = vsel %vm470, %v34, 0
    %v514 = vsel %vm470, %v35, 0
    %v517 = vsel %vm470, %v36, 0
    %v520 = vsel %vm470, %v37, 0
    %v523 = vsel %vm470, %v38, 0
    %v526 = vsel %vm470, %v39, 0
    %v529 = vsel %vm470, %v40, 0
    %v532 = vsel %vm470, %v41, 0
    %v535 = vsel %vm470, %v42, 0
    %v538 = vsel %vm470, %v43, 0
    %v541 = vsel %vm470, %v44, 0
    %v544 = vsel %vm470, %v45, 0
    %v547 = vsel %vm470, %v46, 0
    %v550 = vsel %vm470, %v47, 0
    %v553 = vsel %vm470, %v48, 0
    %v556 = vsel %vm470, %v49, 0
    %v559 = vsel %vm470, %v50, 0
    %v562 = vsel %vm470, %v51, 0
    %v565 = vsel %vm470, %v52, 0
    %v568 = vsel %vm470, %v53, 0
    %v571 = vsel %vm470, %v54, 0
    %v574 = vsel %vm470, %v55, 0
    %v577 = vsel %vm470, %v56, 0
    %v580 = vsel %vm470, %v57, 0
    %v583 = vsel %vm470, %v58, 0
    %v586 = vsel %vm470, %v59, 0
    %v589 = vsel %vm470, %v60, 0
    %v592 = vsel %vm470, %v61, 0
    %v595 = vsel %vm470, %v62, 0
    %v598 = vsel %vm470, %v63, 0
    %v601 = vsel %vm470, %v64, 0
    %v604 = vsel %vm470, %v65, 0
    %v607 = vsel %vm470, %v66, 0
    %v610 = vsel %vm470, %v67, 0
    %v613 = vsel %vm470, %v68, 0
    %v616 = vsel %vm470, %v69, 0
    %v619 = vsel %vm470, %v70, 0
    %v622 = vsel %vm470, %v71, 0
    %v625 = vsel %vm470, %v72, 0
    %v628 = vsel %vm470, %v73, 0
    %v631 = vsel %vm470, %v74, 0
    %v634 = vsel %vm470, %v75, 0
    %v637 = vsel %vm470, %v76, 0
    %v640 = vsel %vm470, %v77, 0
    %v643 = vsel %vm470, %v78, 0
    %v646 = vsel %vm470, %v79, 0
    %v649 = vsel %vm470, %v80, 0
    %v652 = vsel %vm470, %v81, 0
    %v655 = vsel %vm470, %v82, 0
    %v658 = vsel %vm470, %v83, 0
    %v661 = vsel %vm470, %v84, 0
    %vm663 = vcmask 1042432
    %v665 = vsel %vm663, %v85, 0
    %667 = vmatpush.msra.mxu0 0.0
    %668 = vmatpush.msra.mxu0 0.0
    %669 = vmatpush.msra.mxu0 0.0
    %670 = vmatpush.msra.mxu0 0.0
    %671 = vmatpush.msra.mxu0 0.0
    %672 = vmatpush.msra.mxu0 0.0
    %673 = vmatpush.msra.mxu0 0.0
    %674 = vmatpush.msra.mxu0 0.0
    %675 = vmatpush.msra.mxu0 0.0
    %676 = vmatpush.msra.mxu0 0.0
    %677 = vmatpush.msra.mxu0 0.0
    %678 = vmatpush.msra.mxu0 0.0
    %679 = vmatpush.msra.mxu0 0.0
    %680 = vmatpush.msra.mxu0 0.0
    %681 = vmatpush.msra.mxu0 0.0
    %682 = vmatpush.msra.mxu0 %v665
    %683 = vmatmul.f32.gmra.mxu0 %v472
    %v684 = vpop.f32.mrf.mxu0
    %v685 = vadd.f32 %v153, %v684
    %686 = vmatmul.f32.gmra.mxu0 %v475
    %v687 = vpop.f32.mrf.mxu0
    %v688 = vadd.f32 %v158, %v687
    %689 = vmatmul.f32.gmra.mxu0 %v478
    %v690 = vpop.f32.mrf.mxu0
    %v691 = vadd.f32 %v163, %v690
    %692 = vmatmul.f32.gmra.mxu0 %v481
    %v693 = vpop.f32.mrf.mxu0
    %v694 = vadd.f32 %v168, %v693
    %695 = vmatmul.f32.gmra.mxu0 %v484
    %v696 = vpop.f32.mrf.mxu0
    %v697 = vadd.f32 %v173, %v696
    %698 = vmatmul.f32.gmra.mxu0 %v487
    %v699 = vpop.f32.mrf.mxu0
    %v700 = vadd.f32 %v178, %v699
    %701 = vmatmul.f32.gmra.mxu0 %v490
    %v702 = vpop.f32.mrf.mxu0
    %v703 = vadd.f32 %v183, %v702
    %704 = vmatmul.f32.gmra.mxu0 %v493
    %v705 = vpop.f32.mrf.mxu0
    %v706 = vadd.f32 %v188, %v705
    %707 = vmatmul.f32.gmra.mxu0 %v496
    %v708 = vpop.f32.mrf.mxu0
    %v709 = vadd.f32 %v193, %v708
    %710 = vmatmul.f32.gmra.mxu0 %v499
    %v711 = vpop.f32.mrf.mxu0
    %v712 = vadd.f32 %v198, %v711
    %713 = vmatmul.f32.gmra.mxu0 %v502
    %v714 = vpop.f32.mrf.mxu0
    %v715 = vadd.f32 %v203, %v714
    %716 = vmatmul.f32.gmra.mxu0 %v505
    %v717 = vpop.f32.mrf.mxu0
    %v718 = vadd.f32 %v208, %v717
    %719 = vmatmul.f32.gmra.mxu0 %v508
    %v720 = vpop.f32.mrf.mxu0
    %v721 = vadd.f32 %v213, %v720
    %722 = vmatmul.f32.gmra.mxu0 %v511
    %v723 = vpop.f32.mrf.mxu0
    %v724 = vadd.f32 %v218, %v723
    %725 = vmatmul.f32.gmra.mxu0 %v514
    %v726 = vpop.f32.mrf.mxu0
    %v727 = vadd.f32 %v223, %v726
    %728 = vmatmul.f32.gmra.mxu0 %v517
    %v729 = vpop.f32.mrf.mxu0
    %v730 = vadd.f32 %v228, %v729
    %731 = vmatmul.f32.gmra.mxu0 %v520
    %v732 = vpop.f32.mrf.mxu0
    %v733 = vadd.f32 %v233, %v732
    %734 = vmatmul.f32.gmra.mxu0 %v523
    %v735 = vpop.f32.mrf.mxu0
    %v736 = vadd.f32 %v238, %v735
    %737 = vmatmul.f32.gmra.mxu0 %v526
    %v738 = vpop.f32.mrf.mxu0
    %v739 = vadd.f32 %v243, %v738
    %740 = vmatmul.f32.gmra.mxu0 %v529
    %v741 = vpop.f32.mrf.mxu0
    %v742 = vadd.f32 %v248, %v741
    %743 = vmatmul.f32.gmra.mxu0 %v532
    %v744 = vpop.f32.mrf.mxu0
    %v745 = vadd.f32 %v253, %v744
    %746 = vmatmul.f32.gmra.mxu0 %v535
    %v747 = vpop.f32.mrf.mxu0
    %v748 = vadd.f32 %v258, %v747
    %749 = vmatmul.f32.gmra.mxu0 %v538
    %v750 = vpop.f32.mrf.mxu0
    %v751 = vadd.f32 %v263, %v750
    %752 = vmatmul.f32.gmra.mxu0 %v541
    %v753 = vpop.f32.mrf.mxu0
    %v754 = vadd.f32 %v268, %v753
    %755 = vmatmul.f32.gmra.mxu0 %v544
    %v756 = vpop.f32.mrf.mxu0
    %v757 = vadd.f32 %v273, %v756
    %758 = vmatmul.f32.gmra.mxu0 %v547
    %v759 = vpop.f32.mrf.mxu0
    %v760 = vadd.f32 %v278, %v759
    %761 = vmatmul.f32.gmra.mxu0 %v550
    %v762 = vpop.f32.mrf.mxu0
    %v763 = vadd.f32 %v283, %v762
    %764 = vmatmul.f32.gmra.mxu0 %v553
    %v765 = vpop.f32.mrf.mxu0
    %v766 = vadd.f32 %v288, %v765
    %767 = vmatmul.f32.gmra.mxu0 %v556
    %v768 = vpop.f32.mrf.mxu0
    %v769 = vadd.f32 %v293, %v768
    %770 = vmatmul.f32.gmra.mxu0 %v559
    %v771 = vpop.f32.mrf.mxu0
    %v772 = vadd.f32 %v298, %v771
    %773 = vmatmul.f32.gmra.mxu0 %v562
    %v774 = vpop.f32.mrf.mxu0
    %v775 = vadd.f32 %v303, %v774
    %776 = vmatmul.f32.gmra.mxu0 %v565
    %v777 = vpop.f32.mrf.mxu0
    %v778 = vadd.f32 %v308, %v777
    %779 = vmatmul.f32.gmra.mxu0 %v568
    %v780 = vpop.f32.mrf.mxu0
    %v781 = vadd.f32 %v313, %v780
    %782 = vmatmul.f32.gmra.mxu0 %v571
    %v783 = vpop.f32.mrf.mxu0
    %v784 = vadd.f32 %v318, %v783
    %785 = vmatmul.f32.gmra.mxu0 %v574
    %v786 = vpop.f32.mrf.mxu0
    %v787 = vadd.f32 %v323, %v786
    %788 = vmatmul.f32.gmra.mxu0 %v577
    %v789 = vpop.f32.mrf.mxu0
    %v790 = vadd.f32 %v328, %v789
    %791 = vmatmul.f32.gmra.mxu0 %v580
    %v792 = vpop.f32.mrf.mxu0
    %v793 = vadd.f32 %v333, %v792
    %794 = vmatmul.f32.gmra.mxu0 %v583
    %v795 = vpop.f32.mrf.mxu0
    %v796 = vadd.f32 %v338, %v795
    %797 = vmatmul.f32.gmra.mxu0 %v586
    %v798 = vpop.f32.mrf.mxu0
    %v799 = vadd.f32 %v343, %v798
    %800 = vmatmul.f32.gmra.mxu0 %v589
    %v801 = vpop.f32.mrf.mxu0
    %v802 = vadd.f32 %v348, %v801
    %803 = vmatmul.f32.gmra.mxu0 %v592
    %v804 = vpop.f32.mrf.mxu0
    %v805 = vadd.f32 %v353, %v804
    %806 = vmatmul.f32.gmra.mxu0 %v595
    %v807 = vpop.f32.mrf.mxu0
    %v808 = vadd.f32 %v358, %v807
    %809 = vmatmul.f32.gmra.mxu0 %v598
    %v810 = vpop.f32.mrf.mxu0
    %v811 = vadd.f32 %v363, %v810
    %812 = vmatmul.f32.gmra.mxu0 %v601
    %v813 = vpop.f32.mrf.mxu0
    %v814 = vadd.f32 %v368, %v813
    %815 = vmatmul.f32.gmra.mxu0 %v604
    %v816 = vpop.f32.mrf.mxu0
    %v817 = vadd.f32 %v373, %v816
    %818 = vmatmul.f32.gmra.mxu0 %v607
    %v819 = vpop.f32.mrf.mxu0
    %v820 = vadd.f32 %v378, %v819
    %821 = vmatmul.f32.gmra.mxu0 %v610
    %v822 = vpop.f32.mrf.mxu0
    %v823 = vadd.f32 %v383, %v822
    %824 = vmatmul.f32.gmra.mxu0 %v613
    %v825 = vpop.f32.mrf.mxu0
    %v826 = vadd.f32 %v388, %v825
    %827 = vmatmul.f32.gmra.mxu0 %v616
    %v828 = vpop.f32.mrf.mxu0
    %v829 = vadd.f32 %v393, %v828
    %830 = vmatmul.f32.gmra.mxu0 %v619
    %v831 = vpop.f32.mrf.mxu0
    %v832 = vadd.f32 %v398, %v831
    %833 = vmatmul.f32.gmra.mxu0 %v622
    %v834 = vpop.f32.mrf.mxu0
    %v835 = vadd.f32 %v403, %v834
    %836 = vmatmul.f32.gmra.mxu0 %v625
    %v837 = vpop.f32.mrf.mxu0
    %v838 = vadd.f32 %v408, %v837
    %839 = vmatmul.f32.gmra.mxu0 %v628
    %v840 = vpop.f32.mrf.mxu0
    %v841 = vadd.f32 %v413, %v840
    %842 = vmatmul.f32.gmra.mxu0 %v631
    %v843 = vpop.f32.mrf.mxu0
    %v844 = vadd.f32 %v418, %v843
    %845 = vmatmul.f32.gmra.mxu0 %v634
    %v846 = vpop.f32.mrf.mxu0
    %v847 = vadd.f32 %v423, %v846
    %848 = vmatmul.f32.gmra.mxu0 %v637
    %v849 = vpop.f32.mrf.mxu0
    %v850 = vadd.f32 %v428, %v849
    %851 = vmatmul.f32.gmra.mxu0 %v640
    %v852 = vpop.f32.mrf.mxu0
    %v853 = vadd.f32 %v433, %v852
    %854 = vmatmul.f32.gmra.mxu0 %v643
    %v855 = vpop.f32.mrf.mxu0
    %v856 = vadd.f32 %v438, %v855
    %857 = vmatmul.f32.gmra.mxu0 %v646
    %v858 = vpop.f32.mrf.mxu0
    %v859 = vadd.f32 %v443, %v858
    %860 = vmatmul.f32.gmra.mxu0 %v649
    %v861 = vpop.f32.mrf.mxu0
    %v862 = vadd.f32 %v448, %v861
    %863 = vmatmul.f32.gmra.mxu0 %v652
    %v864 = vpop.f32.mrf.mxu0
    %v865 = vadd.f32 %v453, %v864
    %866 = vmatmul.f32.gmra.mxu0 %v655
    %v867 = vpop.f32.mrf.mxu0
    %v868 = vadd.f32 %v458, %v867
    %869 = vmatmul.f32.gmra.mxu0 %v658
    %v870 = vpop.f32.mrf.mxu0
    %v871 = vadd.f32 %v463, %v870
    %872 = vmatmul.f32.gmra.mxu0 %v661
    %v873 = vpop.f32.mrf.mxu0
    %v874 = vadd.f32 %v468, %v873
    %875 = vdwg.mxu0
    %v876 = vmax.f32 %v685, 0.0
    %v877 = vmax.f32 %v688, 0.0
    %v878 = vmax.f32 %v691, 0.0
    %v879 = vmax.f32 %v694, 0.0
    %v880 = vmax.f32 %v697, 0.0
    %v881 = vmax.f32 %v700, 0.0
    %v882 = vmax.f32 %v703, 0.0
    %v883 = vmax.f32 %v706, 0.0
    %v884 = vmax.f32 %v709, 0.0
    %v885 = vmax.f32 %v712, 0.0
    %v886 = vmax.f32 %v715, 0.0
    %v887 = vmax.f32 %v718, 0.0
    %v888 = vmax.f32 %v721, 0.0
    %v889 = vmax.f32 %v724, 0.0
    %v890 = vmax.f32 %v727, 0.0
    %v891 = vmax.f32 %v730, 0.0
    %v892 = vmax.f32 %v733, 0.0
    %v893 = vmax.f32 %v736, 0.0
    %v894 = vmax.f32 %v739, 0.0
    %v895 = vmax.f32 %v742, 0.0
    %v896 = vmax.f32 %v745, 0.0
    %v897 = vmax.f32 %v748, 0.0
    %v898 = vmax.f32 %v751, 0.0
    %v899 = vmax.f32 %v754, 0.0
    %v900 = vmax.f32 %v757, 0.0
    %v901 = vmax.f32 %v760, 0.0
    %v902 = vmax.f32 %v763, 0.0
    %v903 = vmax.f32 %v766, 0.0
    %v904 = vmax.f32 %v769, 0.0
    %v905 = vmax.f32 %v772, 0.0
    %v906 = vmax.f32 %v775, 0.0
    %v907 = vmax.f32 %v778, 0.0
    %v908 = vmax.f32 %v781, 0.0
    %v909 = vmax.f32 %v784, 0.0
    %v910 = vmax.f32 %v787, 0.0
    %v911 = vmax.f32 %v790, 0.0
    %v912 = vmax.f32 %v793, 0.0
    %v913 = vmax.f32 %v796, 0.0
    %v914 = vmax.f32 %v799, 0.0
    %v915 = vmax.f32 %v802, 0.0
    %v916 = vmax.f32 %v805, 0.0
    %v917 = vmax.f32 %v808, 0.0
    %v918 = vmax.f32 %v811, 0.0
    %v919 = vmax.f32 %v814, 0.0
    %v920 = vmax.f32 %v817, 0.0
    %v921 = vmax.f32 %v820, 0.0
    %v922 = vmax.f32 %v823, 0.0
    %v923 = vmax.f32 %v826, 0.0
    %v924 = vmax.f32 %v829, 0.0
    %v925 = vmax.f32 %v832, 0.0
    %v926 = vmax.f32 %v835, 0.0
    %v927 = vmax.f32 %v838, 0.0
    %v928 = vmax.f32 %v841, 0.0
    %v929 = vmax.f32 %v844, 0.0
    %v930 = vmax.f32 %v847, 0.0
    %v931 = vmax.f32 %v850, 0.0
    %v932 = vmax.f32 %v853, 0.0
    %v933 = vmax.f32 %v856, 0.0
    %v934 = vmax.f32 %v859, 0.0
    %v935 = vmax.f32 %v862, 0.0
    %v936 = vmax.f32 %v865, 0.0
    %v937 = vmax.f32 %v868, 0.0
    %v938 = vmax.f32 %v871, 0.0
    %v939 = vmax.f32 %v874, 0.0
    %v940 = vld [vmem:[%s3] sm:$0xff]
    %v941 = vld [vmem:[%s3 + $0x8] sm:$0xff]
    %v942 = vld [vmem:[%s3 + $0x10] sm:$0xff]
    %v943 = vld [vmem:[%s3 + $0x18] sm:$0xff]
    %v944 = vld [vmem:[%s4] sm:$0xff]
    %946 = vset.pattern.permute.xlu0 0
    %947 = vperm.xlu0 %946, %v944
    %v948 = vpop.permute.xlu0 %947
    %950 = vmatpush.msra.mxu0 %v891
    %951 = vmatpush.msra.mxu0 %v890
    %952 = vmatpush.msra.mxu0 %v889
    %953 = vmatpush.msra.mxu0 %v888
    %954 = vmatpush.msra.mxu0 %v887
    %955 = vmatpush.msra.mxu0 %v886
    %956 = vmatpush.msra.mxu0 %v885
    %957 = vmatpush.msra.mxu0 %v884
    %958 = vmatpush.msra.mxu0 %v883
    %959 = vmatpush.msra.mxu0 %v882
    %960 = vmatpush.msra.mxu0 %v881
    %961 = vmatpush.msra.mxu0 %v880
    %962 = vmatpush.msra.mxu0 %v879
    %963 = vmatpush.msra.mxu0 %v878
    %964 = vmatpush.msra.mxu0 %v877
    %965 = vmatpush.msra.mxu0 %v876
    %966 = vmatmul.f32.gmra.mxu0 %v940
    %v967 = vpop.f32.mrf.mxu0
    %v968 = vadd.f32 %v948, %v967
    %969 = vdwg.mxu0
    %970 = vmatpush.msra.mxu0 %v907
    %971 = vmatpush.msra.mxu0 %v906
    %972 = vmatpush.msra.mxu0 %v905
    %973 = vmatpush.msra.mxu0 %v904
    %974 = vmatpush.msra.mxu0 %v903
    %975 = vmatpush.msra.mxu0 %v902
    %976 = vmatpush.msra.mxu0 %v901
    %977 = vmatpush.msra.mxu0 %v900
    %978 = vmatpush.msra.mxu0 %v899
    %979 = vmatpush.msra.mxu0 %v898
    %980 = vmatpush.msra.mxu0 %v897
    %981 = vmatpush.msra.mxu0 %v896
    %982 = vmatpush.msra.mxu0 %v895
    %983 = vmatpush.msra.mxu0 %v894
    %984 = vmatpush.msra.mxu0 %v893
    %985 = vmatpush.msra.mxu0 %v892
    %986 = vmatmul.f32.gmra.mxu0 %v941
    %v987 = vpop.f32.mrf.mxu0
    %v988 = vadd.f32 %v968, %v987
    %989 = vdwg.mxu0
    %990 = vmatpush.msra.mxu0 %v923
    %991 = vmatpush.msra.mxu0 %v922
    %992 = vmatpush.msra.mxu0 %v921
    %993 = vmatpush.msra.mxu0 %v920
    %994 = vmatpush.msra.mxu0 %v919
    %995 = vmatpush.msra.mxu0 %v918
    %996 = vmatpush.msra.mxu0 %v917
    %997 = vmatpush.msra.mxu0 %v916
    %998 = vmatpush.msra.mxu0 %v915
    %999 = vmatpush.msra.mxu0 %v914
    %1000 = vmatpush.msra.mxu0 %v913
    %1001 = vmatpush.msra.mxu0 %v912
    %1002 = vmatpush.msra.mxu0 %v911
    %1003 = vmatpush.msra.mxu0 %v910
    %1004 = vmatpush.msra.mxu0 %v909
    %1005 = vmatpush.msra.mxu0 %v908
    %1006 = vmatmul.f32.gmra.mxu0 %v942
    %v1007 = vpop.f32.mrf.mxu0
    %v1008 = vadd.f32 %v988, %v1007
    %1009 = vdwg.mxu0
    %1010 = vmatpush.msra.mxu0 %v939
    %1011 = vmatpush.msra.mxu0 %v938
    %1012 = vmatpush.msra.mxu0 %v937
    %1013 = vmatpush.msra.mxu0 %v936
    %1014 = vmatpush.msra.mxu0 %v935
    %1015 = vmatpush.msra.mxu0 %v934
    %1016 = vmatpush.msra.mxu0 %v933
    %1017 = vmatpush.msra.mxu0 %v932
    %1018 = vmatpush.msra.mxu0 %v931
    %1019 = vmatpush.msra.mxu0 %v930
    %1020 = vmatpush.msra.mxu0 %v929
    %1021 = vmatpush.msra.mxu0 %v928
    %1022 = vmatpush.msra.mxu0 %v927
    %1023 = vmatpush.msra.mxu0 %v926
    %1024 = vmatpush.msra.mxu0 %v925
    %1025 = vmatpush.msra.mxu0 %v924
    %1026 = vmatmul.f32.gmra.mxu0 %v943
    %v1027 = vpop.f32.mrf.mxu0
    %v1028 = vadd.f32 %v1008, %v1027
    %1029 = vdwg.mxu0
    %vm1030 = vcmask 64512
    %1031 = vst.msk [vmem:[#allocation2] sm:$0xff] %vm1030, %v1028
    // Predicated region
    $region22: #{tpu_custom_call.1} parent=1 // pred_check
      _
    $region23: #{tpu_custom_call.1} parent=1 // pred_check_branch
      %1033 = sbr.rel (0) target = $region25
    $region24: #{tpu_custom_call.1} parent=1 // pred_region
      %1035 = vsyncadd [#allocation3], 0
      %s1037 = sshll.u32 [#allocation2], 4
      %s1038 = int_to_ptr.vmem [resolvable:$true] %s1037
      %s1039 = sshll.u32 %s5, 4
      %s1040 = int_to_ptr.hbm [resolvable:$true] %s1039
      %1042 = dma.vmem_to_hbm [thread:$0]  %s1038, 128, %s1040, [#allocation3]
    $region25: #{tpu_custom_call.1} parent=1 // pred_fallthru
      _
    // Predicated region
    $region26: #{tpu_custom_call.1} parent=1 // pred_check
      _
    $region27: #{tpu_custom_call.1} parent=1 // pred_check_branch
      %1044 = sbr.rel (0) target = $region29
    $region28: #{tpu_custom_call.1} parent=1 // pred_region
      %1046 = dma.done [#allocation3], 128
    $region29: #{tpu_custom_call.1} parent=1 // pred_fallthru
      _
    %1047 = vsyncpa [#allocation3], 1

</llo_original>
